<compile_context>
chip_gen: v5e
topology: v5e:2x2
jax: 0.10.0
libtpu: 0.0.40
codegen_flags: <defaults>
</compile_context>

<pallas_src>
import functools

import jax
import jax.numpy as jnp
from jax.experimental import pallas as pl
from jax.experimental.pallas import tpu as pltpu


# ----------------------------------------------------------------------------
# Setup-time weight construction (depends only on the parameters, not inputs).
# ----------------------------------------------------------------------------
def _build_ar_weight(kernel, L):
    """(p,1,K,K) -> (K*L, K*p) with W[c*L+j, m*p+lag] = (j==lag) * kernel[lag,0,c,m]."""
    p, _, K, _ = kernel.shape
    k0 = kernel[:, 0]                              # (p, K, K)  [lag, c, m]
    eye = jnp.eye(L, p, dtype=k0.dtype)            # eye[j, lag]
    w4 = jnp.einsum("jl,lcm->cjml", eye, k0)       # (K, L, K, p)
    return w4.reshape(K * L, K * p)


def _build_ma_weight(rkernel, batch, p):
    """(q,1,K,K) -> (B*K*(q-p), B*K) block-diagonal weight for the MA overhang.

    Rows index the flattened overhang slice of the input (m, c, l-p); columns are
    (m, i) -> m*K + i, i.e. already in the final output-column layout demanded by
    torch's `ar + ma` broadcast (K == p). Sign is folded into the weight.
    Only the overhang lags l >= p are present (zero initial state).
    """
    q, _, K, _ = rkernel.shape
    r_ov = -rkernel[p:, 0]                                            # (q-p, K, K) [l', c, i]
    eye_b = jnp.eye(batch, dtype=r_ov.dtype)
    w5 = jnp.einsum("mn,lci->mclni", eye_b, r_ov)                     # (B, K, q-p, B, K)
    return w5.reshape(batch * K * (q - p), batch * K)


def build_arma_weights(kernel, rkernel, *, p, q, batch, lags):
    """Build the MXU weights once; cache/reuse across calls (they only depend on params)."""
    _, _, K, _ = kernel.shape
    assert kernel.shape == (p, 1, K, K), "kernel must be (p, units=1, k, k)"
    assert rkernel.shape == (q, 1, K, K), "recurrent_kernel must be (q, units=1, k, k)"
    w_ar = _build_ar_weight(kernel, lags)                              # (K*L, K*p)
    w_ma = _build_ma_weight(rkernel, batch, p) if q > p else None      # (B*K*(q-p), B*K)
    return w_ar, w_ma


# ----------------------------------------------------------------------------
# Per-call apply: input reshapes + one gridless pallas_call (1-2 MXU matmuls).
# ----------------------------------------------------------------------------
def arma_pallas_apply(inputs, w_ar, w_ma, *, p, q, activation="linear"):
    """inputs: (B, K, L) f32; w_ar/w_ma from build_arma_weights."""
    B, K, L = inputs.shape
    assert 0 < p <= L and q > 0
    has_ma = w_ma is not None
    if has_ma:
        assert q > p
        assert L == q, "torch overhang branch broadcasts inputs' lag dim against q"
        assert w_ma.shape == (B * K * (q - p), B * K)
    # torch's `ar + ma` broadcast only type-checks when these hold (units == 1):
    assert B == K and p == K, "torch semantics require batch == k*units == p"
    assert w_ar.shape == (K * L, K * p)

    relu = activation != "linear"
    out_dtype = inputs.dtype
    itemsize = jnp.dtype(out_dtype).itemsize

    # Operand prep: x_flat is a free reshape; x_row is a tiny (B*K*(q-p)) slice.
    x_flat = inputs.reshape(B, K * L)                    # x_flat[b, c*L + lag]
    operands = [x_flat, w_ar]

    flops = 2 * B * (K * L) * (K * p)
    bytes_accessed = (x_flat.size + w_ar.size + B * K * p) * itemsize
    if has_ma:
        ov = q - p
        x_row = inputs[:, :, p:q].reshape(1, B * K * ov)  # overhang lags only
        operands += [x_row, w_ma]
        flops += 2 * (B * K * ov) * (B * K) + B * K * p
        bytes_accessed += (x_row.size + w_ma.size) * itemsize

    def arma_kernel(*refs):
        if has_ma:
            x_ref, war_ref, xr_ref, wma_ref, o_ref = refs
        else:
            x_ref, war_ref, o_ref = refs
        out = jnp.dot(x_ref[...], war_ref[...], preferred_element_type=jnp.float32)
        if has_ma:
            ma_row = jnp.dot(xr_ref[...], wma_ref[...],
                             preferred_element_type=jnp.float32)     # (1, K*p)
            out = out + ma_row        # sublane broadcast == torch's right-aligned ar+ma
        if relu:
            out = jnp.maximum(out, 0.0)
        o_ref[...] = out.astype(o_ref.dtype)

    # Gridless, fully VMEM-resident call: no software pipeline / double buffering
    # for a single-shot ~170 KiB working set.
    vmem_spec = pl.BlockSpec(memory_space=pltpu.MemorySpace.VMEM)
    flat = pl.pallas_call(
        arma_kernel,
        out_shape=jax.ShapeDtypeStruct((B, K * p), out_dtype),
        in_specs=[vmem_spec] * len(operands),
        out_specs=vmem_spec,
        cost_estimate=pl.CostEstimate(
            flops=int(flops), transcendentals=0, bytes_accessed=int(bytes_accessed)),
    )(*operands)

    # Layout plumbing only: kernel columns are ordered m*p + lag, so this reshape
    # is contiguous (no transpose / data movement).
    return flat.reshape(B, K, p)


def arma_pallas(inputs, kernel, rkernel, *, p, q, activation="linear"):
    """Convenience wrapper (build weights + apply). Keep under jax.jit so the tiny
    weight-build einsums fuse / constant-fold; prefer build_arma_weights + the
    jitted apply when the parameters are reused across calls."""
    B, K, L = inputs.shape
    w_ar, w_ma = build_arma_weights(kernel, rkernel, p=p, q=q, batch=B, lags=L)
    return arma_pallas_apply(inputs, w_ar, w_ma, p=p, q=q, activation=activation)


# ----------------------------------------------------------------------------
# Pure-JAX reference (transcription of ARMA.forward incl. torch broadcasts).
# ----------------------------------------------------------------------------
def arma_forward_ref(inputs, kernel, rkernel, *, p, q, units, k):
    B = inputs.shape[0]
    state = jnp.zeros((B, k * units, q), jnp.float32)
    input_state = state.reshape(B, k, units, q)
    ar_out = [jnp.matmul(inputs[:, :, i], kernel[i]) for i in range(p)]  # (units,B,k) each
    ar = jnp.stack(ar_out, axis=-1).reshape(-1, k * units, p)
    ma_out = []
    for i in range(q):
        if i + 1 > p:
            lhs = input_state - inputs[:, :, None, :]
        else:
            lhs = input_state
        ma_unit = [jnp.matmul(lhs[:, :, j, i], rkernel[i, j]) for j in range(units)]
        ma_out.append(jnp.stack(ma_unit, axis=-1))
    ma = sum(ma_out).reshape(-1, k * units)
    return ar + ma  # same broadcasting rule as torch


if __name__ == "__main__":
    key = jax.random.PRNGKey(0)
    k1, k2, k3, k4 = jax.random.split(key, 4)

    # Module config: input_dim = (K, LAGS), p = 8, q = 16 (> p, exercises the MA
    # overhang), units = 1, activation = 'linear', use_bias = False, return_lags = False.
    B, K, UNITS = 8, 8, 1
    P, Q, LAGS = 8, 16, 16

    x = jax.random.normal(k1, (B, K, LAGS), dtype=jnp.float32)
    # nn.init.uniform_ -> U[0, 1)
    kernel = jax.random.uniform(k2, (P, UNITS, K, K), dtype=jnp.float32)
    rkernel = jax.random.uniform(k3, (Q, UNITS, K, K), dtype=jnp.float32)

    # Config 1: cached weights (built once at setup) + jitted per-call apply.
    w_ar, w_ma = build_arma_weights(kernel, rkernel, p=P, q=Q, batch=B, lags=LAGS)
    apply_fn = jax.jit(functools.partial(arma_pallas_apply, p=P, q=Q, activation="linear"))
    out = jax.block_until_ready(apply_fn(x, w_ar, w_ma))
    ref = arma_forward_ref(x, kernel, rkernel, p=P, q=Q, units=UNITS, k=K)
    assert out.shape == ref.shape == (B, K * UNITS, P)
    assert jnp.allclose(out, ref, atol=1e-4, rtol=1e-4), float(jnp.max(jnp.abs(out - ref)))

    # Config 2: q <= p (no MA overhang) exercises the AR-only kernel path via the
    # all-in-one wrapper under a single jit.
    Q2 = 4
    rkernel2 = jax.random.uniform(k4, (Q2, UNITS, K, K), dtype=jnp.float32)
    arma2 = jax.jit(functools.partial(arma_pallas, p=P, q=Q2, activation="linear"))
    out2 = jax.block_until_ready(arma2(x, kernel, rkernel2))
    ref2 = arma_forward_ref(x, kernel, rkernel2, p=P, q=Q2, units=UNITS, k=K)
    assert out2.shape == ref2.shape == (B, K * UNITS, P)
    assert jnp.allclose(out2, ref2, atol=1e-4, rtol=1e-4), float(jnp.max(jnp.abs(out2 - ref2)))

    print("KERNEL_OK")
</pallas_src>

<mosaic_0001>
module attributes {stable_mosaic.version = 11 : i64} {
  func.func @arma_kernel(%arg0: memref<8x128xf32, #tpu.memory_space<vmem>>, %arg1: memref<128x64xf32, #tpu.memory_space<vmem>>, %arg2: memref<1x512xf32, #tpu.memory_space<vmem>>, %arg3: memref<512x64xf32, #tpu.memory_space<vmem>>, %arg4: memref<8x64xf32, #tpu.memory_space<vmem>>) attributes {dimension_semantics = [], scalar_prefetch = 0 : i64, scratch_operands = 0 : i64, tpu.core_type = #tpu.core_type<tc>} {
    %c0 = arith.constant 0 : index
    %c0_0 = arith.constant 0 : index
    %0 = vector.load %arg0[%c0, %c0_0] : memref<8x128xf32, #tpu.memory_space<vmem>>, vector<8x128xf32>
    %c0_1 = arith.constant 0 : index
    %c0_2 = arith.constant 0 : index
    %1 = vector.load %arg1[%c0_1, %c0_2] : memref<128x64xf32, #tpu.memory_space<vmem>>, vector<128x64xf32>
    %cst = arith.constant dense<0.000000e+00> : vector<8x64xf32>
    %2 = tpu.matmul %0, %1, %cst {dimension_numbers = #tpu.dot_dimension_numbers<[1], [0], [0], [1], [0, 0, 1, 1], [], []>} : vector<8x128xf32>, vector<128x64xf32>, vector<8x64xf32> -> vector<8x64xf32>
    %c0_3 = arith.constant 0 : index
    %c0_4 = arith.constant 0 : index
    %3 = vector.load %arg2[%c0_3, %c0_4] : memref<1x512xf32, #tpu.memory_space<vmem>>, vector<1x512xf32>
    %c0_5 = arith.constant 0 : index
    %c0_6 = arith.constant 0 : index
    %4 = vector.load %arg3[%c0_5, %c0_6] : memref<512x64xf32, #tpu.memory_space<vmem>>, vector<512x64xf32>
    %cst_7 = arith.constant dense<0.000000e+00> : vector<1x64xf32>
    %5 = tpu.matmul %3, %4, %cst_7 {dimension_numbers = #tpu.dot_dimension_numbers<[1], [0], [0], [1], [0, 0, 1, 1], [], []>} : vector<1x512xf32>, vector<512x64xf32>, vector<1x64xf32> -> vector<1x64xf32>
    %6 = vector.broadcast %5 : vector<1x64xf32> to vector<8x64xf32>
    %7 = arith.addf %2, %6 : vector<8x64xf32>
    %c0_8 = arith.constant 0 : index
    %c0_9 = arith.constant 0 : index
    %8 = vector.load %arg4[%c0_8, %c0_9] : memref<8x64xf32, #tpu.memory_space<vmem>>, vector<8x64xf32>
    tpu.vector_store %arg4[%c0_8, %c0_9], %7 {strides = array<i32>} : memref<8x64xf32, #tpu.memory_space<vmem>>, vector<8x64xf32>,
    return
  }
}

</mosaic_0001>

<llo_original>
// kernel: arma_pallas_apply.1
$region0: #{arma_pallas_apply.1}
  #allocation0 [shape = 'u32[]', space=smem, size = 0x4, offset = 0x4, fixed_abs, tag = 'smem constant byte address 0x4 - core index']
  #allocation1 [shape = 'u32[72,128]{1,0:T(1,128)}', space=vmem, size = 0x9000, scoped, tag = 'internal scratch']
  %s0 = inlined_call_operand.vmem [shape: f32[8,128], index: 0, kind: input, shape index: {}]
  %s1 = inlined_call_operand.vmem [shape: f32[128,64], index: 1, kind: input, shape index: {}]
  %s2 = inlined_call_operand.vmem [shape: f32[1,512], index: 2, kind: input, shape index: {}]
  %s3 = inlined_call_operand.vmem [shape: f32[512,64], index: 3, kind: input, shape index: {}]
  %s4 = inlined_call_operand.vmem [shape: f32[8,64], index: 4, kind: output, shape index: {}]
  %s5 = sld [smem:[#allocation0]]
  $region26: #{arma_pallas_apply.1} parent=0
    _
  %s7 = ssub.s32 1, %s5
  %s8 = scalar_select 0, %s7, %s5
  // Predicated region
  $region2: #{arma_pallas_apply.1} parent=0 // pred_check
    _
  $region3: #{arma_pallas_apply.1} parent=0 // pred_check_branch
    %10 = sbr.rel (0) target = $region5
  $region4: #{arma_pallas_apply.1} parent=0 // pred_region
    _
  $region5: #{arma_pallas_apply.1} parent=0 // pred_fallthru
    _
  // Predicated region
  $region6: #{arma_pallas_apply.1} parent=0 // pred_check
    _
  $region7: #{arma_pallas_apply.1} parent=0 // pred_check_branch
    %12 = sbr.rel (0) target = $region9
  $region8: #{arma_pallas_apply.1} parent=0 // pred_region
    _
  $region9: #{arma_pallas_apply.1} parent=0 // pred_fallthru
    _
  // Predicated region
  $region10: #{arma_pallas_apply.1} parent=0 // pred_check
    _
  $region11: #{arma_pallas_apply.1} parent=0 // pred_check_branch
    %14 = sbr.rel (0) target = $region13
  $region12: #{arma_pallas_apply.1} parent=0 // pred_region
    _
  $region13: #{arma_pallas_apply.1} parent=0 // pred_fallthru
    _
  // Predicated region
  $region14: #{arma_pallas_apply.1} parent=0 // pred_check
    _
  $region15: #{arma_pallas_apply.1} parent=0 // pred_check_branch
    %16 = sbr.rel (0) target = $region17
  $region16: #{arma_pallas_apply.1} parent=0 // pred_region
    _
  $region17: #{arma_pallas_apply.1} parent=0 // pred_fallthru
    _
  %v17 = vld [vmem:[%s0] sm:$0xff]
  %v18 = vld [vmem:[%s1] sm:$0xff]
  %v19 = vld [vmem:[%s1 + $0x8] sm:$0xff]
  %v20 = vld [vmem:[%s1 + $0x10] sm:$0xff]
  %v21 = vld [vmem:[%s1 + $0x18] sm:$0xff]
  %v22 = vld [vmem:[%s1 + $0x20] sm:$0xff]
  %v23 = vld [vmem:[%s1 + $0x28] sm:$0xff]
  %v24 = vld [vmem:[%s1 + $0x30] sm:$0xff]
  %v25 = vld [vmem:[%s1 + $0x38] sm:$0xff]
  %v26 = vld [vmem:[%s1 + $0x40] sm:$0xff]
  %v27 = vld [vmem:[%s1 + $0x48] sm:$0xff]
  %v28 = vld [vmem:[%s1 + $0x50] sm:$0xff]
  %v29 = vld [vmem:[%s1 + $0x58] sm:$0xff]
  %v30 = vld [vmem:[%s1 + $0x60] sm:$0xff]
  %v31 = vld [vmem:[%s1 + $0x68] sm:$0xff]
  %v32 = vld [vmem:[%s1 + $0x70] sm:$0xff]
  %v33 = vld [vmem:[%s1 + $0x78] sm:$0xff]
  %v34 = vld [vmem:[%s2] sm:$0xf]
  %v35 = vld [vmem:[%s3] sm:$0xff]
  %v36 = vld [vmem:[%s3 + $0x8] sm:$0xff]
  %v37 = vld [vmem:[%s3 + $0x10] sm:$0xff]
  %v38 = vld [vmem:[%s3 + $0x18] sm:$0xff]
  %v39 = vld [vmem:[%s3 + $0x20] sm:$0xff]
  %v40 = vld [vmem:[%s3 + $0x28] sm:$0xff]
  %v41 = vld [vmem:[%s3 + $0x30] sm:$0xff]
  %v42 = vld [vmem:[%s3 + $0x38] sm:$0xff]
  %v43 = vld [vmem:[%s3 + $0x40] sm:$0xff]
  %v44 = vld [vmem:[%s3 + $0x48] sm:$0xff]
  %v45 = vld [vmem:[%s3 + $0x50] sm:$0xff]
  %v46 = vld [vmem:[%s3 + $0x58] sm:$0xff]
  %v47 = vld [vmem:[%s3 + $0x60] sm:$0xff]
  %v48 = vld [vmem:[%s3 + $0x68] sm:$0xff]
  %v49 = vld [vmem:[%s3 + $0x70] sm:$0xff]
  %v50 = vld [vmem:[%s3 + $0x78] sm:$0xff]
  %v51 = vld [vmem:[%s3 + $0x80] sm:$0xff]
  %v52 = vld [vmem:[%s3 + $0x88] sm:$0xff]
  %v53 = vld [vmem:[%s3 + $0x90] sm:$0xff]
  %v54 = vld [vmem:[%s3 + $0x98] sm:$0xff]
  %v55 = vld [vmem:[%s3 + $0xa0] sm:$0xff]
  %v56 = vld [vmem:[%s3 + $0xa8] sm:$0xff]
  %v57 = vld [vmem:[%s3 + $0xb0] sm:$0xff]
  %v58 = vld [vmem:[%s3 + $0xb8] sm:$0xff]
  %v59 = vld [vmem:[%s3 + $0xc0] sm:$0xff]
  %v60 = vld [vmem:[%s3 + $0xc8] sm:$0xff]
  %v61 = vld [vmem:[%s3 + $0xd0] sm:$0xff]
  %v62 = vld [vmem:[%s3 + $0xd8] sm:$0xff]
  %v63 = vld [vmem:[%s3 + $0xe0] sm:$0xff]
  %v64 = vld [vmem:[%s3 + $0xe8] sm:$0xff]
  %v65 = vld [vmem:[%s3 + $0xf0] sm:$0xff]
  %v66 = vld [vmem:[%s3 + $0xf8] sm:$0xff]
  %v67 = vld [vmem:[%s3 + $0x100] sm:$0xff]
  %v68 = vld [vmem:[%s3 + $0x108] sm:$0xff]
  %v69 = vld [vmem:[%s3 + $0x110] sm:$0xff]
  %v70 = vld [vmem:[%s3 + $0x118] sm:$0xff]
  %v71 = vld [vmem:[%s3 + $0x120] sm:$0xff]
  %v72 = vld [vmem:[%s3 + $0x128] sm:$0xff]
  %v73 = vld [vmem:[%s3 + $0x130] sm:$0xff]
  %v74 = vld [vmem:[%s3 + $0x138] sm:$0xff]
  %v75 = vld [vmem:[%s3 + $0x140] sm:$0xff]
  %v76 = vld [vmem:[%s3 + $0x148] sm:$0xff]
  %v77 = vld [vmem:[%s3 + $0x150] sm:$0xff]
  %v78 = vld [vmem:[%s3 + $0x158] sm:$0xff]
  %v79 = vld [vmem:[%s3 + $0x160] sm:$0xff]
  %v80 = vld [vmem:[%s3 + $0x168] sm:$0xff]
  %v81 = vld [vmem:[%s3 + $0x170] sm:$0xff]
  %v82 = vld [vmem:[%s3 + $0x178] sm:$0xff]
  %v83 = vld [vmem:[%s3 + $0x180] sm:$0xff]
  %v84 = vld [vmem:[%s3 + $0x188] sm:$0xff]
  %v85 = vld [vmem:[%s3 + $0x190] sm:$0xff]
  %v86 = vld [vmem:[%s3 + $0x198] sm:$0xff]
  %v87 = vld [vmem:[%s3 + $0x1a0] sm:$0xff]
  %v88 = vld [vmem:[%s3 + $0x1a8] sm:$0xff]
  %v89 = vld [vmem:[%s3 + $0x1b0] sm:$0xff]
  %v90 = vld [vmem:[%s3 + $0x1b8] sm:$0xff]
  %v91 = vld [vmem:[%s3 + $0x1c0] sm:$0xff]
  %v92 = vld [vmem:[%s3 + $0x1c8] sm:$0xff]
  %v93 = vld [vmem:[%s3 + $0x1d0] sm:$0xff]
  %v94 = vld [vmem:[%s3 + $0x1d8] sm:$0xff]
  %v95 = vld [vmem:[%s3 + $0x1e0] sm:$0xff]
  %v96 = vld [vmem:[%s3 + $0x1e8] sm:$0xff]
  %v97 = vld [vmem:[%s3 + $0x1f0] sm:$0xff]
  %v98 = vld [vmem:[%s3 + $0x1f8] sm:$0xff]
  %v100 = vperm.slane %v34, 0
  %v101 = vperm.slane %v34, 1
  %v102 = vperm.slane %v34, 2
  %v103 = vperm.slane %v34, 3
  %108 = vmatpush.msra.mxu0 %v50
  %109 = vmatpush.msra.mxu0 %v49
  %110 = vmatpush.msra.mxu0 %v48
  %111 = vmatpush.msra.mxu0 %v47
  %112 = vmatpush.msra.mxu0 %v46
  %113 = vmatpush.msra.mxu0 %v45
  %114 = vmatpush.msra.mxu0 %v44
  %115 = vmatpush.msra.mxu0 %v43
  %116 = vmatpush.msra.mxu0 %v42
  %117 = vmatpush.msra.mxu0 %v41
  %118 = vmatpush.msra.mxu0 %v40
  %119 = vmatpush.msra.mxu0 %v39
  %120 = vmatpush.msra.mxu0 %v38
  %121 = vmatpush.msra.mxu0 %v37
  %122 = vmatpush.msra.mxu0 %v36
  %123 = vmatpush.msra.mxu0 %v35
  %124 = vmatmul.f32.gmra.mxu0 %v100
  %v125 = vpop.f32.mrf.mxu0
  %v126 = vadd.f32 0.0, %v125
  %127 = vdwg.mxu0
  %128 = vmatpush.msra.mxu0 %v66
  %129 = vmatpush.msra.mxu0 %v65
  %130 = vmatpush.msra.mxu0 %v64
  %131 = vmatpush.msra.mxu0 %v63
  %132 = vmatpush.msra.mxu0 %v62
  %133 = vmatpush.msra.mxu0 %v61
  %134 = vmatpush.msra.mxu0 %v60
  %135 = vmatpush.msra.mxu0 %v59
  %136 = vmatpush.msra.mxu0 %v58
  %137 = vmatpush.msra.mxu0 %v57
  %138 = vmatpush.msra.mxu0 %v56
  %139 = vmatpush.msra.mxu0 %v55
  %140 = vmatpush.msra.mxu0 %v54
  %141 = vmatpush.msra.mxu0 %v53
  %142 = vmatpush.msra.mxu0 %v52
  %143 = vmatpush.msra.mxu0 %v51
  %144 = vmatmul.f32.gmra.mxu0 %v101
  %v145 = vpop.f32.mrf.mxu0
  %v146 = vadd.f32 %v126, %v145
  %147 = vdwg.mxu0
  %148 = vmatpush.msra.mxu0 %v82
  %149 = vmatpush.msra.mxu0 %v81
  %150 = vmatpush.msra.mxu0 %v80
  %151 = vmatpush.msra.mxu0 %v79
  %152 = vmatpush.msra.mxu0 %v78
  %153 = vmatpush.msra.mxu0 %v77
  %154 = vmatpush.msra.mxu0 %v76
  %155 = vmatpush.msra.mxu0 %v75
  %156 = vmatpush.msra.mxu0 %v74
  %157 = vmatpush.msra.mxu0 %v73
  %158 = vmatpush.msra.mxu0 %v72
  %159 = vmatpush.msra.mxu0 %v71
  %160 = vmatpush.msra.mxu0 %v70
  %161 = vmatpush.msra.mxu0 %v69
  %162 = vmatpush.msra.mxu0 %v68
  %163 = vmatpush.msra.mxu0 %v67
  %164 = vmatmul.f32.gmra.mxu0 %v102
  %v165 = vpop.f32.mrf.mxu0
  %v166 = vadd.f32 %v146, %v165
  %167 = vdwg.mxu0
  %168 = vmatpush.msra.mxu0 %v98
  %169 = vmatpush.msra.mxu0 %v97
  %170 = vmatpush.msra.mxu0 %v96
  %171 = vmatpush.msra.mxu0 %v95
  %172 = vmatpush.msra.mxu0 %v94
  %173 = vmatpush.msra.mxu0 %v93
  %174 = vmatpush.msra.mxu0 %v92
  %175 = vmatpush.msra.mxu0 %v91
  %176 = vmatpush.msra.mxu0 %v90
  %177 = vmatpush.msra.mxu0 %v89
  %178 = vmatpush.msra.mxu0 %v88
  %179 = vmatpush.msra.mxu0 %v87
  %180 = vmatpush.msra.mxu0 %v86
  %181 = vmatpush.msra.mxu0 %v85
  %182 = vmatpush.msra.mxu0 %v84
  %183 = vmatpush.msra.mxu0 %v83
  %184 = vmatmul.f32.gmra.mxu0 %v103
  %v185 = vpop.f32.mrf.mxu0
  %v186 = vadd.f32 %v166, %v185
  %187 = vdwg.mxu0
  %v188 = vperm.slane %v186, 0
  %189 = vmatpush.msra.mxu0 %v33
  %190 = vmatpush.msra.mxu0 %v32
  %191 = vmatpush.msra.mxu0 %v31
  %192 = vmatpush.msra.mxu0 %v30
  %193 = vmatpush.msra.mxu0 %v29
  %194 = vmatpush.msra.mxu0 %v28
  %195 = vmatpush.msra.mxu0 %v27
  %196 = vmatpush.msra.mxu0 %v26
  %197 = vmatpush.msra.mxu0 %v25
  %198 = vmatpush.msra.mxu0 %v24
  %199 = vmatpush.msra.mxu0 %v23
  %200 = vmatpush.msra.mxu0 %v22
  %201 = vmatpush.msra.mxu0 %v21
  %202 = vmatpush.msra.mxu0 %v20
  %203 = vmatpush.msra.mxu0 %v19
  %204 = vmatpush.msra.mxu0 %v18
  %205 = vmatmul.f32.gmra.mxu0 %v17
  %v206 = vpop.f32.mrf.mxu0
  %v207 = vadd.f32 %v188, %v206
  %208 = vdwg.mxu0
  %vm209 = vcmask 523264
  %210 = vst.msk [vmem:[%s4] sm:$0xff] %vm209, %v207
  // Predicated region
  $region18: #{arma_pallas_apply.1} parent=0 // pred_check
    _
  $region19: #{arma_pallas_apply.1} parent=0 // pred_check_branch
    %212 = sbr.rel (0) target = $region21
  $region20: #{arma_pallas_apply.1} parent=0 // pred_region
    _
  $region21: #{arma_pallas_apply.1} parent=0 // pred_fallthru
    _
  // Predicated region
  $region22: #{arma_pallas_apply.1} parent=0 // pred_check
    _
  $region23: #{arma_pallas_apply.1} parent=0 // pred_check_branch
    %214 = sbr.rel (0) target = $region25
  $region24: #{arma_pallas_apply.1} parent=0 // pred_region
    _
  $region25: #{arma_pallas_apply.1} parent=0 // pred_fallthru
    _

</llo_original>
